<compile_context>
chip_gen: v7x
topology: tpu7x:2x2x1
jax: 0.10.0
libtpu: 0.0.40
codegen_flags: <defaults>
</compile_context>

<pallas_src>
import jax
import jax.numpy as jnp
from jax import lax
from jax.experimental import pallas as pl
from jax.experimental.pallas import tpu as pltpu


def _linear_kernel(x_ref, w_ref, b_ref, o_ref):
    # x_ref: (tm, in_dim)        -- one batch tile
    # w_ref: (out_dim, in_dim)   -- full weight, native PyTorch nn.Linear layout
    # b_ref: (1, out_dim)        -- full bias
    # o_ref: (tm, out_dim)       -- unpadded output tile
    #
    # x @ W^T directly on the MXU: contract x dim 1 with W dim 1.
    acc = lax.dot_general(
        x_ref[...],
        w_ref[...],
        dimension_numbers=(((1,), (1,)), ((), ())),
        preferred_element_type=jnp.float32,
    )
    o_ref[...] = (acc + b_ref[...]).astype(o_ref.dtype)


def softmax_module_forward(x, weight, bias, *, block_m=2048):
    """Pallas equivalent of `Softmax.forward` (a single nn.Linear).

    Args:
      x:      (batch, last_p_dim) float32
      weight: (out_dim, last_p_dim) float32   -- PyTorch nn.Linear layout
      bias:   (out_dim,) float32
    Returns:
      (batch, out_dim) float32
    """
    batch, in_dim = x.shape
    out_dim = weight.shape[0]
    b2 = bias.reshape(1, out_dim)  # trivial; no padding needed

    # ---- Batch tiling: pipeline x-in / y-out tiles; weight/bias resident. ----
    tm = min(block_m, batch)
    # If one tile would swallow the whole batch (and the batch is big enough
    # to split on 8-row sublane boundaries), halve it so the grid keeps >= 2
    # steps: v7x's two TensorCores can then share the "parallel" batch axis.
    if batch > 8 and tm >= batch:
        half = (batch + 1) // 2
        tm = min(batch, max(8, ((half + 7) // 8) * 8))
    grid = (pl.cdiv(batch, tm),)

    return pl.pallas_call(
        _linear_kernel,
        out_shape=jax.ShapeDtypeStruct((batch, out_dim), x.dtype),
        grid=grid,
        in_specs=[
            pl.BlockSpec((tm, in_dim), lambda i: (i, 0)),        # x tile
            pl.BlockSpec((out_dim, in_dim), lambda i: (0, 0)),   # full weight
            pl.BlockSpec((1, out_dim), lambda i: (0, 0)),        # full bias
        ],
        out_specs=pl.BlockSpec((tm, out_dim), lambda i: (i, 0)),
        compiler_params=pltpu.CompilerParams(
            dimension_semantics=("parallel",),   # megacore split on v7x
        ),
    )(x, weight, b2)


if __name__ == "__main__":
    # Shapes implied by the module: last_p_dim=100 (default), out_dim=10 classes.
    batch = 64
    last_p_dim = 100
    out_dim = 10

    key = jax.random.PRNGKey(0)
    kx, kw, kb = jax.random.split(key, 3)

    x = jax.random.normal(kx, (batch, last_p_dim), dtype=jnp.float32)
    # Deterministic parameter init (mimics nn.Linear's uniform(-1/sqrt(in), 1/sqrt(in)))
    bound = 1.0 / (last_p_dim ** 0.5)
    weight = jax.random.uniform(kw, (out_dim, last_p_dim), jnp.float32, -bound, bound)
    bias = jax.random.uniform(kb, (out_dim,), jnp.float32, -bound, bound)

    out = softmax_module_forward(x, weight, bias)
    out = jax.block_until_ready(out)

    # Reference check against plain JAX linear.
    ref = x @ weight.T + bias
    assert out.shape == (batch, out_dim)
    assert jnp.allclose(out, ref, atol=1e-5, rtol=1e-5)

    print("KERNEL_OK")
</pallas_src>

<mosaic_0001>
module attributes {stable_mosaic.version = 11 : i64} {
  func.func @_linear_kernel(%arg0: i32, %arg1: memref<32x100xf32, #tpu.memory_space<vmem>>, %arg2: memref<10x100xf32, #tpu.memory_space<vmem>>, %arg3: memref<1x10xf32, #tpu.memory_space<vmem>>, %arg4: memref<32x10xf32, #tpu.memory_space<vmem>>) attributes {dimension_semantics = [#tpu.dimension_semantics<parallel>], iteration_bounds = array<i64: 2>, scalar_prefetch = 0 : i64, scratch_operands = 0 : i64, tpu.core_type = #tpu.core_type<tc>, window_params = [{transform_indices = @transform_0, window_bounds = array<i64: 32, 100>}, {pipeline_mode = #tpu.pipeline_mode<synchronous>, transform_indices = @transform_1, window_bounds = array<i64: 10, 100>}, {pipeline_mode = #tpu.pipeline_mode<synchronous>, transform_indices = @transform_2, window_bounds = array<i64: 1, 10>}, {transform_indices = @transform_3, window_bounds = array<i64: 32, 10>}]} {
    %c0 = arith.constant 0 : index
    %c0_0 = arith.constant 0 : index
    %0 = vector.load %arg1[%c0, %c0_0] : memref<32x100xf32, #tpu.memory_space<vmem>>, vector<32x100xf32>
    %c0_1 = arith.constant 0 : index
    %c0_2 = arith.constant 0 : index
    %1 = vector.load %arg2[%c0_1, %c0_2] : memref<10x100xf32, #tpu.memory_space<vmem>>, vector<10x100xf32>
    %cst = arith.constant dense<0.000000e+00> : vector<32x10xf32>
    %2 = tpu.matmul %0, %1, %cst {dimension_numbers = #tpu.dot_dimension_numbers<[1], [1], [0], [0], [0, 0, 1, 0], [], []>} : vector<32x100xf32>, vector<10x100xf32>, vector<32x10xf32> -> vector<32x10xf32>
    %c0_3 = arith.constant 0 : index
    %c0_4 = arith.constant 0 : index
    %3 = vector.load %arg3[%c0_3, %c0_4] : memref<1x10xf32, #tpu.memory_space<vmem>>, vector<1x10xf32>
    %4 = vector.broadcast %3 : vector<1x10xf32> to vector<32x10xf32>
    %5 = arith.addf %2, %4 : vector<32x10xf32>
    %c0_5 = arith.constant 0 : index
    %c0_6 = arith.constant 0 : index
    %6 = vector.load %arg4[%c0_5, %c0_6] : memref<32x10xf32, #tpu.memory_space<vmem>>, vector<32x10xf32>
    tpu.vector_store %arg4[%c0_5, %c0_6], %5 {strides = array<i32>} : memref<32x10xf32, #tpu.memory_space<vmem>>, vector<32x10xf32>,
    return
  }
  func.func @transform_0(%arg0: i32) -> (i32, i32) {
    %c0_i32 = arith.constant 0 : i32
    %c0_i32_0 = arith.constant 0 : i32
    return %arg0, %c0_i32 : i32, i32
  }
  func.func @transform_1(%arg0: i32) -> (i32, i32) {
    %c0_i32 = arith.constant 0 : i32
    %c0_i32_0 = arith.constant 0 : i32
    %c0_i32_1 = arith.constant 0 : i32
    return %c0_i32, %c0_i32_0 : i32, i32
  }
  func.func @transform_2(%arg0: i32) -> (i32, i32) {
    %c0_i32 = arith.constant 0 : i32
    %c0_i32_0 = arith.constant 0 : i32
    %c0_i32_1 = arith.constant 0 : i32
    return %c0_i32, %c0_i32_0 : i32, i32
  }
  func.func @transform_3(%arg0: i32) -> (i32, i32) {
    %c0_i32 = arith.constant 0 : i32
    %c0_i32_0 = arith.constant 0 : i32
    return %arg0, %c0_i32 : i32, i32
  }
}

</mosaic_0001>

<llo_original>
// kernel: tpu_custom_call.1
$region0: #{tpu_custom_call.1}
  #allocation0 [shape = 'u32[]', space=smem, size = 0x4, offset = 0x4, fixed_abs, tag = 'smem constant byte address 0x4 - core index']
  #allocation1 [shape = 'u32[144,128]{1,0:T(1,128)}', space=vmem, size = 0x12000, scoped, tag = 'internal scratch']
  %s0 = inlined_call_operand.hbm [shape: f32[64,100], index: 0, kind: input, shape index: {}]
  %s1 = inlined_call_operand.hbm [shape: f32[10,100], index: 1, kind: input, shape index: {}]
  %s2 = inlined_call_operand.vmem [shape: f32[1,10], index: 2, kind: input, shape index: {}]
  %s3 = inlined_call_operand.vmem [shape: f32[64,10], index: 3, kind: output, shape index: {}]
  %s4 = sld [smem:[#allocation0]]
  $region53: #{tpu_custom_call.1} parent=0
    _
  %s6 = ssub.s32 1, %s4
  %s7 = scalar_select 0, %s6, %s4
  $region1: #{tpu_custom_call.1} parent=0
    #allocation2 [shape = 'u8[32768]{0}', space=vmem, size = 0x8000, scoped, tag = 'input window, operand 0']
    #allocation3 [shape = 's32[2]{0}', space=sflag, size = 0x8, scoped, tag = 'scoped memory for tpu_custom_call.1']
    #allocation4 [shape = 'u8[8192]{0}', space=vmem, size = 0x2000, scoped, tag = 'input window, operand 1, single buffered']
    #allocation5 [shape = 's32[1]{0}', space=sflag, size = 0x4, scoped, tag = 'scoped memory for tpu_custom_call.1']
    %8 = vsyncpa [#allocation3], 0
    %s9 = scalar_lea.sflag [#allocation3], 1
    %10 = vsyncpa %s9, 0
    %11 = vsyncpa [#allocation5], 0
    loop: start=0, step=1, limit=4
    $region2: #{tpu_custom_call.1} parent=1 // loop_pre_header
      _
    $region3: #{tpu_custom_call.1} parent=1 // loop_header
      %s13 = sphi 0, %s17
      %p14 = scmp.ge.s32.totalorder %s13, 4
      %s23 = sphi 0, %s25
      %s26 = sphi 0, %s23
      %s27 = sphi 0, %s26
      %s43 = sphi 0, %s27
      %s47 = sphi 0, %s47
      %s49 = sphi 0, %s47
      %s50 = sphi 0, %s49
      %s64 = sphi 0, %s50
      %s68 = sphi 0, %s68
      %s70 = sphi 0, %s68
      %s71 = sphi 0, %s70
      %s85 = sphi 0, %s71
      %s91 = sphi 0, %s93
      %s94 = sphi 0, %s91
      %s95 = sphi 0, %s94
      %s111 = sphi 0, %s95
    $region4: #{tpu_custom_call.1} parent=1 // loop_header_branch
      %16 = sbr.rel (%p14) target = $region8
    $region5: #{tpu_custom_call.1} parent=1 // loop_body
      %s18 = ssub.s32 %s13, 1
      %s19 = ssub.s32 %s13, 2
      %s20 = sadd.s32 %s13, 1
      %s21 = ssub.s32 %s13, %s20
      %p22 = scmp.eq.s32.totalorder %s21, 0
      %s24 = sadd.s32 %s23, 1
      %s25 = scalar_select %p22, %s23, %s24
      %p28 = pneg %p22
      %p29 = scmp.eq.s32.totalorder %s13, 1
      %p30 = por %p28, %p29
      %p31 = scmp.ne.s32.totalorder %s23, %s26
      %p32 = scmp.eq.s32.totalorder %s13, 0
      %p33 = por %p31, %p32
      %p34 = scmp.ne.s32.totalorder %s23, %s26
      %p35 = scmp.eq.s32.totalorder %s18, 1
      %p36 = por %p34, %p35
      %p37 = scmp.ne.s32.totalorder %s26, %s27
      %p38 = scmp.eq.s32.totalorder %s18, 0
      %p39 = por %p37, %p38
      %p40 = scmp.ne.s32.totalorder %s26, %s27
      %p41 = scmp.eq.s32.totalorder %s19, 1
      %p42 = por %p40, %p41
      %p44 = scmp.ne.s32.totalorder %s27, %s43
      %p45 = scmp.eq.s32.totalorder %s19, 0
      %p46 = por %p44, %p45
      %s48 = sadd.s32 %s47, 1
      %p51 = scmp.eq.s32.totalorder %s13, 1
      %p52 = scmp.ne.s32.totalorder %s47, %s49
      %p53 = scmp.eq.s32.totalorder %s13, 0
      %p54 = por %p52, %p53
      %p55 = scmp.ne.s32.totalorder %s47, %s49
      %p56 = scmp.eq.s32.totalorder %s18, 1
      %p57 = por %p55, %p56
      %p58 = scmp.ne.s32.totalorder %s49, %s50
      %p59 = scmp.eq.s32.totalorder %s18, 0
      %p60 = por %p58, %p59
      %p61 = scmp.ne.s32.totalorder %s49, %s50
      %p62 = scmp.eq.s32.totalorder %s19, 1
      %p63 = por %p61, %p62
      %p65 = scmp.ne.s32.totalorder %s50, %s64
      %p66 = scmp.eq.s32.totalorder %s19, 0
      %p67 = por %p65, %p66
      %s69 = sadd.s32 %s68, 1
      %p72 = scmp.eq.s32.totalorder %s13, 1
      %p73 = scmp.ne.s32.totalorder %s68, %s70
      %p74 = scmp.eq.s32.totalorder %s13, 0
      %p75 = por %p73, %p74
      %p76 = scmp.ne.s32.totalorder %s68, %s70
      %p77 = scmp.eq.s32.totalorder %s18, 1
      %p78 = por %p76, %p77
      %p79 = scmp.ne.s32.totalorder %s70, %s71
      %p80 = scmp.eq.s32.totalorder %s18, 0
      %p81 = por %p79, %p80
      %p82 = scmp.ne.s32.totalorder %s70, %s71
      %p83 = scmp.eq.s32.totalorder %s19, 1
      %p84 = por %p82, %p83
      %p86 = scmp.ne.s32.totalorder %s71, %s85
      %p87 = scmp.eq.s32.totalorder %s19, 0
      %p88 = por %p86, %p87
      %s89 = ssub.s32 %s13, %s20
      %p90 = scmp.eq.s32.totalorder %s89, 0
      %s92 = sadd.s32 %s91, 1
      %s93 = scalar_select %p90, %s91, %s92
      %p96 = pneg %p90
      %p97 = scmp.eq.s32.totalorder %s13, 1
      %p98 = por %p96, %p97
      %p99 = scmp.ne.s32.totalorder %s91, %s94
      %p100 = scmp.eq.s32.totalorder %s13, 0
      %p101 = por %p99, %p100
      %p102 = scmp.ne.s32.totalorder %s91, %s94
      %p103 = scmp.eq.s32.totalorder %s18, 1
      %p104 = por %p102, %p103
      %p105 = scmp.ne.s32.totalorder %s94, %s95
      %p106 = scmp.eq.s32.totalorder %s18, 0
      %p107 = por %p105, %p106
      %p108 = scmp.ne.s32.totalorder %s94, %s95
      %p109 = scmp.eq.s32.totalorder %s19, 1
      %p110 = por %p108, %p109
      %p112 = scmp.ne.s32.totalorder %s95, %s111
      %p113 = scmp.eq.s32.totalorder %s19, 0
      %p114 = por %p112, %p113
      %p115 = scmp.le.s32.totalorder 1, %s13
      %p116 = scmp.lt.s32.totalorder %s13, 3
      %p117 = pnand %p115, %p116
      %p118 = pneg %p117
      // Predicated region
      $region9: #{tpu_custom_call.1} parent=5 // pred_check
        _
      $region10: #{tpu_custom_call.1} parent=5 // pred_check_branch
        %120 = sbr.rel (%p117) target = $region12
      $region11: #{tpu_custom_call.1} parent=5 // pred_region
        %s121 = ssub.s32 %s13, 1
        // Predicated region
        $region13: #{tpu_custom_call.1} parent=11 // pred_check
          %p122 = pneg %p60
        $region14: #{tpu_custom_call.1} parent=11 // pred_check_branch
          %124 = sbr.rel (%p122) target = $region16
        $region15: #{tpu_custom_call.1} parent=11 // pred_region
          %s126 = ssub.s32 256, 256
          %127 = vsyncadd [#allocation5], %s126
          %s128 = sshll.u32 [#allocation4], 4
          %s129 = int_to_ptr.vmem [resolvable:$true] %s128
          %134 = dma.hbm_to_vmem [thread:$0]  %s1, 256, %s129, [#allocation5], 128, 128, 8
        $region16: #{tpu_custom_call.1} parent=11 // pred_fallthru
          _
        // Predicated region
        $region17: #{tpu_custom_call.1} parent=11 // pred_check
          %p135 = pneg %p81
        $region18: #{tpu_custom_call.1} parent=11 // pred_check_branch
          %137 = sbr.rel (%p135) target = $region20
        $region19: #{tpu_custom_call.1} parent=11 // pred_region
          _
        $region20: #{tpu_custom_call.1} parent=11 // pred_fallthru
          _
      $region12: #{tpu_custom_call.1} parent=5 // pred_fallthru
        _
      %p138 = scmp.lt.s32.totalorder %s13, 2
      // Predicated region
      $region21: #{tpu_custom_call.1} parent=5 // pred_check
        %p139 = pneg %p138
      $region22: #{tpu_custom_call.1} parent=5 // pred_check_branch
        %141 = sbr.rel (%p139) target = $region24
      $region23: #{tpu_custom_call.1} parent=5 // pred_region
        // Predicated region
        $region25: #{tpu_custom_call.1} parent=23 // pred_check
          %p142 = pneg %p33
        $region26: #{tpu_custom_call.1} parent=23 // pred_check_branch
          %144 = sbr.rel (%p142) target = $region28
        $region27: #{tpu_custom_call.1} parent=23 // pred_region
          %s145 = sand.u32 %s23, 1
          %s146 = scalar_lea.sflag [#allocation3], %s145
          %s147 = sand.u32 %s23, 1
          %s148 = smul.addr %s147, 32
          %s149 = scalar_lea.vmem [#allocation2], %s148
          %s150 = smul.u32 4, %s13
          %s152 = ssub.s32 512, 512
          %153 = vsyncadd %s146, %s152
          %s154 = smul.addr %s150, 128
          %s155 = scalar_lea.hbm %s0, %s154
          %s156 = sshll.u32 %s149, 4
          %s157 = int_to_ptr.vmem [resolvable:$true] %s156
          %162 = dma.hbm_to_vmem [thread:$0]  %s155, 512, %s157, %s146, 128, 128, 8
        $region28: #{tpu_custom_call.1} parent=23 // pred_fallthru
          _
      $region24: #{tpu_custom_call.1} parent=5 // pred_fallthru
        _
      %p163 = scmp.le.s32.totalorder 1, %s13
      %p164 = scmp.lt.s32.totalorder %s13, 3
      %p165 = pnand %p163, %p164
      %p166 = pneg %p165
      // Predicated region
      $region29: #{tpu_custom_call.1} parent=5 // pred_check
        _
      $region30: #{tpu_custom_call.1} parent=5 // pred_check_branch
        %168 = sbr.rel (%p165) target = $region32
      $region31: #{tpu_custom_call.1} parent=5 // pred_region
        %s169 = ssub.s32 %s13, 1
        %s170 = sand.u32 %s26, 1
        %s171 = scalar_lea.sflag [#allocation3], %s170
        %s172 = sand.u32 %s26, 1
        %s173 = smul.addr %s172, 32
        %s174 = scalar_lea.vmem [#allocation2], %s173
        // Predicated region
        $region33: #{tpu_custom_call.1} parent=31 // pred_check
          %p175 = pneg %p39
        $region34: #{tpu_custom_call.1} parent=31 // pred_check_branch
          %177 = sbr.rel (%p175) target = $region36
        $region35: #{tpu_custom_call.1} parent=31 // pred_region
          %178 = dma.done %s171, 512
        $region36: #{tpu_custom_call.1} parent=31 // pred_fallthru
          _
        // Predicated region
        $region37: #{tpu_custom_call.1} parent=31 // pred_check
          %p179 = pneg %p60
        $region38: #{tpu_custom_call.1} parent=31 // pred_check_branch
          %181 = sbr.rel (%p179) target = $region40
        $region39: #{tpu_custom_call.1} parent=31 // pred_region
          %182 = dma.done [#allocation5], 256
        $region40: #{tpu_custom_call.1} parent=31 // pred_fallthru
          _
        %s183 = sand.u32 %s26, 1
        %s184 = scalar_lea.sflag [#allocation3], %s183
        %s185 = sand.u32 %s26, 1
        %s186 = smul.addr %s185, 32
        %s187 = scalar_lea.vmem [#allocation2], %s186
        %p188 = pneg %p39
        %p189 = pneg %p36
        %p190 = pneg %p60
        %p191 = pneg %p57
        %p192 = pneg %p81
        %p193 = pneg %p78
        %p194 = pneg %p107
        %p195 = pneg %p104
        %s196 = smul.u32 4, %s18
        %p197 = scmp.lt.s32.totalorder %s196, 7
        %s198 = scalar_select %p197, %s196, 7
        %s199 = smul.addr %s198, 8
        %s200 = scalar_lea.vmem %s3, %s199
        %s201 = smul.u32 4, %s18
        %s202 = smul.u32 4, %s18
        %p203 = scmp.lt.s32.totalorder %s202, 7
        %s204 = scalar_select %p203, %s202, 7
        %s205 = smul.addr %s204, 8
        %s206 = scalar_lea.vmem %s3, %s205
        %s207 = smul.u32 4, %s18
        %v208 = vld [vmem:[%s174] sm:$0xff]
        %v209 = vld [vmem:[%s174 + $0x8] sm:$0xff]
        %v210 = vld [vmem:[%s174 + $0x10] sm:$0xff]
        %v211 = vld [vmem:[%s174 + $0x18] sm:$0xff]
        %v212 = vld [vmem:[#allocation4] sm:$0xff]
        %v213 = vld [vmem:[#allocation4 + $0x8] sm:$0x3]
        %v214 = vld [vmem:[%s2] sm:$0x1]
        %v216 = vlaneseq
        %v217 = vshrl.u32 %v216, 7
        %v218 = vsub.s32 0, %v217
        %v219 = vrot.slane %v214, %v218
        %vm221 = vcmask 818176
        %v223 = vsel %vm221, %v208, 0
        %v226 = vsel %vm221, %v209, 0
        %v229 = vsel %vm221, %v210, 0
        %v232 = vsel %vm221, %v211, 0
        %v235 = vsel %vm221, %v212, 0
        %v238 = vsel %vm221, %v213, 0
        %240 = vmatprep.subr.mxu0 0.0
        %241 = vmatpush1.xpose.msra.mxu0 %v235
        %242 = vmatprep.subr.mxu0 0.0
        %243 = vmatpush1.xpose.msra.mxu0 %v238
        %244 = vmatprep.subr.mxu0 0.0
        %245 = vmatpush1.xpose.msra.mxu0 0.0
        %246 = vmatprep.subr.mxu0 0.0
        %247 = vmatpush1.xpose.msra.mxu0 0.0
        %248 = vmatprep.subr.mxu0 0.0
        %249 = vmatpush1.xpose.msra.mxu0 0.0
        %250 = vmatprep.subr.mxu0 0.0
        %251 = vmatpush1.xpose.msra.mxu0 0.0
        %252 = vmatprep.subr.mxu0 0.0
        %253 = vmatpush1.xpose.msra.mxu0 0.0
        %254 = vmatprep.subr.mxu0 0.0
        %255 = vmatpush1.xpose.msra.mxu0 0.0
        %256 = vmatprep.subr.mxu0 0.0
        %257 = vmatpush1.xpose.msra.mxu0 0.0
        %258 = vmatprep.subr.mxu0 0.0
        %259 = vmatpush1.xpose.msra.mxu0 0.0
        %260 = vmatprep.subr.mxu0 0.0
        %261 = vmatpush1.xpose.msra.mxu0 0.0
        %262 = vmatprep.subr.mxu0 0.0
        %263 = vmatpush1.xpose.msra.mxu0 0.0
        %264 = vmatprep.subr.mxu0 0.0
        %265 = vmatpush1.xpose.msra.mxu0 0.0
        %266 = vmatprep.subr.mxu0 0.0
        %267 = vmatpush1.xpose.msra.mxu0 0.0
        %268 = vmatprep.subr.mxu0 0.0
        %269 = vmatpush1.xpose.msra.mxu0 0.0
        %270 = vmatprep.subr.mxu0 0.0
        %271 = vmatpush1.xpose.msra.mxu0 0.0
        %272 = vmatprep.subr.mxu0 0.0
        %273 = vmatpush1.xpose.msra.mxu0 0.0
        %274 = vmatprep.subr.mxu0 0.0
        %275 = vmatpush1.xpose.msra.mxu0 0.0
        %276 = vmatprep.subr.mxu0 0.0
        %277 = vmatpush1.xpose.msra.mxu0 0.0
        %278 = vmatprep.subr.mxu0 0.0
        %279 = vmatpush1.xpose.msra.mxu0 0.0
        %280 = vmatprep.subr.mxu0 0.0
        %281 = vmatpush1.xpose.msra.mxu0 0.0
        %282 = vmatprep.subr.mxu0 0.0
        %283 = vmatpush1.xpose.msra.mxu0 0.0
        %284 = vmatprep.subr.mxu0 0.0
        %285 = vmatpush1.xpose.msra.mxu0 0.0
        %286 = vmatprep.subr.mxu0 0.0
        %287 = vmatpush1.xpose.msra.mxu0 0.0
        %288 = vmatprep.subr.mxu0 0.0
        %289 = vmatpush1.xpose.msra.mxu0 0.0
        %290 = vmatprep.subr.mxu0 0.0
        %291 = vmatpush1.xpose.msra.mxu0 0.0
        %292 = vmatprep.subr.mxu0 0.0
        %293 = vmatpush1.xpose.msra.mxu0 0.0
        %294 = vmatprep.subr.mxu0 0.0
        %295 = vmatpush1.xpose.msra.mxu0 0.0
        %296 = vmatprep.subr.mxu0 0.0
        %297 = vmatpush1.xpose.msra.mxu0 0.0
        %298 = vmatprep.subr.mxu0 0.0
        %299 = vmatpush1.xpose.msra.mxu0 0.0
        %300 = vmatprep.subr.mxu0 0.0
        %301 = vmatpush1.xpose.msra.mxu0 0.0
        %302 = vmatprep.subr.mxu0 0.0
        %303 = vmatpush1.xpose.msra.mxu0 0.0
        %304 = vmatprep.mubr.f32.mxu0 0.0
        %305 = vmatmul.mubr.f32.gmra.mrb[0].mxu0 %v223
        %v306 = vpop.f32.mrb[0].mxu0
        %v307 = vadd.f32 %v219, %v306
        %v308 = vpop.f32.mrb[0].mxu0
        %309 = vmatprep.mubr.f32.mxu0 0.0
        %310 = vmatmul.mubr.f32.gmra.mrb[0].mxu0 %v226
        %v311 = vpop.f32.mrb[0].mxu0
        %v312 = vadd.f32 %v219, %v311
        %v313 = vpop.f32.mrb[0].mxu0
        %314 = vmatprep.mubr.f32.mxu0 0.0
        %315 = vmatmul.mubr.f32.gmra.mrb[0].mxu0 %v229
        %v316 = vpop.f32.mrb[0].mxu0
        %v317 = vadd.f32 %v219, %v316
        %v318 = vpop.f32.mrb[0].mxu0
        %319 = vmatprep.mubr.f32.mxu0 0.0
        %320 = vmatmul.mubr.f32.gmra.mrb[0].mxu0 %v232
        %v321 = vpop.f32.mrb[0].mxu0
        %v322 = vadd.f32 %v219, %v321
        %v323 = vpop.f32.mrb[0].mxu0
        %324 = vdwg.mxu0
        %vm325 = vcmask 80896
        %326 = vst.msk [vmem:[%s206] sm:$0xff] %vm325, %v307
        %327 = vst.msk [vmem:[%s206 + $0x8] sm:$0xff] %vm325, %v312
        %328 = vst.msk [vmem:[%s206 + $0x10] sm:$0xff] %vm325, %v317
        %329 = vst.msk [vmem:[%s206 + $0x18] sm:$0xff] %vm325, %v322
        %s330 = smul.u32 4, %s18
        %p331 = scmp.lt.s32.totalorder %s330, 7
        %s332 = scalar_select %p331, %s330, 7
        %s333 = smul.addr %s332, 8
        %s334 = scalar_lea.vmem %s3, %s333
        // Predicated region
        $region41: #{tpu_custom_call.1} parent=31 // pred_check
          %p335 = pneg %p104
        $region42: #{tpu_custom_call.1} parent=31 // pred_check_branch
          %337 = sbr.rel (%p335) target = $region44
        $region43: #{tpu_custom_call.1} parent=31 // pred_region
          %s338 = smul.u32 4, %s18
        $region44: #{tpu_custom_call.1} parent=31 // pred_fallthru
          _
      $region32: #{tpu_custom_call.1} parent=5 // pred_fallthru
        _
      %p339 = scmp.le.s32.totalorder 2, %s13
      // Predicated region
      $region45: #{tpu_custom_call.1} parent=5 // pred_check
        %p340 = pneg %p339
      $region46: #{tpu_custom_call.1} parent=5 // pred_check_branch
        %342 = sbr.rel (%p340) target = $region48
      $region47: #{tpu_custom_call.1} parent=5 // pred_region
        %s343 = ssub.s32 %s13, 2
        // Predicated region
        $region49: #{tpu_custom_call.1} parent=47 // pred_check
          %p344 = pneg %p110
        $region50: #{tpu_custom_call.1} parent=47 // pred_check_branch
          %346 = sbr.rel (%p344) target = $region52
        $region51: #{tpu_custom_call.1} parent=47 // pred_region
          %s347 = smul.u32 4, %s19
          %p348 = scmp.lt.s32.totalorder %s347, 7
          %s349 = scalar_select %p348, %s347, 7
          %s350 = smul.addr %s349, 8
          %s351 = scalar_lea.vmem %s3, %s350
        $region52: #{tpu_custom_call.1} parent=47 // pred_fallthru
          _
      $region48: #{tpu_custom_call.1} parent=5 // pred_fallthru
        _
    $region6: #{tpu_custom_call.1} parent=1 // loop_footer
      %s17 = sadd.s32 1, %s13
    $region7: #{tpu_custom_call.1} parent=1 // loop_footer_branch
      %12 = sbr.rel target = $region3
    $region8: #{tpu_custom_call.1} parent=1 // loop_exit
      _
    %352 = vsyncpa [#allocation3], 1
    %s353 = scalar_lea.sflag [#allocation3], 1
    %354 = vsyncpa %s353, 1
    %355 = vsyncpa [#allocation5], 1

</llo_original>
